<compile_context>
chip_gen: v6e
topology: v6e:2x2x1
jax: 0.10.0
libtpu: 0.0.40
codegen_flags: <defaults>
</compile_context>

<pallas_src>
import jax
import jax.numpy as jnp
from jax.experimental import pallas as pl
from jax.experimental.pallas import tpu as pltpu

EMBEDDING_SIZE = 768
NUM_LABELS = 2
N_PAD = 128          # pad the tiny class dim of W_eff to one lane-width for the MXU
DEFAULT_TILE_B = 1024  # multiple of 8, >=512; ~6 MiB double-buffered f32 x


def _head_kernel(x_ref, w_ref, b_ref, o_ref):
    # x: [TB, D] (f32 or bf16)   w: [D, N_PAD] f32 (cols >= NUM_LABELS are zero)
    # b: [1, NUM_LABELS] f32     o: [TB, NUM_LABELS] f32
    acc = jnp.dot(x_ref[...], w_ref[...], preferred_element_type=jnp.float32)  # MXU
    o_ref[...] = acc[:, :NUM_LABELS] + b_ref[...]   # narrow masked store, VPU add


def fold_classifier_head_params(w_dense, b_dense, w_out, b_out):
    """One-time parameter prep (NOT in the per-call hot path).

    w_dense: [D, D], b_dense: [D], w_out: [D, NUM_LABELS], b_out: [NUM_LABELS]
    (weights stored as [in_features, out_features], i.e. transposed from
     PyTorch's nn.Linear [out, in] convention).

    Returns:
      w_eff_p: [D, N_PAD] float32 (columns >= NUM_LABELS are zero)
      b_eff:   [1, NUM_LABELS] float32
    """
    w_eff = (w_dense @ w_out).astype(jnp.float32)            # [D, NUM_LABELS]
    b_eff = (b_dense @ w_out + b_out).astype(jnp.float32)    # [NUM_LABELS]
    w_eff_p = jnp.zeros((EMBEDDING_SIZE, N_PAD), jnp.float32)
    w_eff_p = w_eff_p.at[:, :NUM_LABELS].set(w_eff)
    return w_eff_p, b_eff.reshape(1, NUM_LABELS)


def classifier_head_pooler(pooled_output, w_eff_p, b_eff, *, tile_b=DEFAULT_TILE_B):
    """pooled_output: [B, D]; (w_eff_p, b_eff) from fold_classifier_head_params."""
    B, D = pooled_output.shape
    assert D == EMBEDDING_SIZE

    # Small B -> single grid point (whole arrays resident in VMEM).
    # Large B -> pipelined grid over B with double-buffered x tiles.
    tb = B if B <= tile_b else tile_b
    grid = (pl.cdiv(B, tb),)

    itemsize = jnp.dtype(pooled_output.dtype).itemsize
    cost = pl.CostEstimate(
        flops=2 * B * D * N_PAD,
        transcendentals=0,
        bytes_accessed=(B * D * itemsize            # x
                        + D * N_PAD * 4             # W_eff
                        + NUM_LABELS * 4            # b_eff
                        + B * NUM_LABELS * 4),      # out
    )

    return pl.pallas_call(
        _head_kernel,
        out_shape=jax.ShapeDtypeStruct((B, NUM_LABELS), jnp.float32),
        grid_spec=pltpu.PrefetchScalarGridSpec(
            num_scalar_prefetch=0,
            grid=grid,
            in_specs=[
                pl.BlockSpec((tb, D), lambda i: (i, 0)),            # x tile
                pl.BlockSpec((D, N_PAD), lambda i: (0, 0)),          # W_eff (fetched once)
                pl.BlockSpec((1, NUM_LABELS), lambda i: (0, 0)),     # b_eff
            ],
            out_specs=pl.BlockSpec((tb, NUM_LABELS), lambda i: (i, 0)),
        ),
        compiler_params=pltpu.CompilerParams(
            dimension_semantics=("parallel",),      # v7x: split B across the 2 TCs
        ),
        cost_estimate=cost,
    )(pooled_output, w_eff_p, b_eff)


def _init_params(key):
    # Deterministic init mimicking nn.Linear default (uniform +-1/sqrt(fan_in)).
    k1, k2, k3, k4 = jax.random.split(key, 4)
    bound = 1.0 / (EMBEDDING_SIZE ** 0.5)
    w_dense = jax.random.uniform(k1, (EMBEDDING_SIZE, EMBEDDING_SIZE),
                                 jnp.float32, -bound, bound)
    b_dense = jax.random.uniform(k2, (EMBEDDING_SIZE,), jnp.float32, -bound, bound)
    w_out = jax.random.uniform(k3, (EMBEDDING_SIZE, NUM_LABELS),
                               jnp.float32, -bound, bound)
    b_out = jax.random.uniform(k4, (NUM_LABELS,), jnp.float32, -bound, bound)
    return w_dense, b_dense, w_out, b_out


if __name__ == "__main__":
    key = jax.random.PRNGKey(0)
    kx, kp = jax.random.split(key)

    B = 8  # small batch; EMBEDDING_SIZE / NUM_LABELS are fixed by the module
    pooled_output = jax.random.normal(kx, (B, EMBEDDING_SIZE), jnp.float32)
    w_dense, b_dense, w_out, b_out = _init_params(kp)

    # One-time parameter prep (fold + pad), outside the hot path.
    w_eff_p, b_eff = fold_classifier_head_params(w_dense, b_dense, w_out, b_out)

    run = jax.jit(classifier_head_pooler)
    out = run(pooled_output, w_eff_p, b_eff)
    out = jax.block_until_ready(out)

    # Pure-JAX reference of the original two-linear forward (dropout = identity).
    ref = (pooled_output @ w_dense + b_dense) @ w_out + b_out
    assert out.shape == (B, NUM_LABELS), out.shape
    assert jnp.allclose(out, ref, atol=2e-2, rtol=2e-2), "mismatch vs reference"

    print("KERNEL_OK")
</pallas_src>

<mosaic_0001>
module attributes {stable_mosaic.version = 11 : i64} {
  func.func @_head_kernel(%arg0: i32, %arg1: memref<8x768xf32, #tpu.memory_space<vmem>>, %arg2: memref<768x128xf32, #tpu.memory_space<vmem>>, %arg3: memref<1x2xf32, #tpu.memory_space<vmem>>, %arg4: memref<8x2xf32, #tpu.memory_space<vmem>>) attributes {dimension_semantics = [#tpu.dimension_semantics<parallel>], iteration_bounds = array<i64: 1>, scalar_prefetch = 0 : i64, scratch_operands = 0 : i64, tpu.core_type = #tpu.core_type<tc>, window_params = [{transform_indices = @transform_0, window_bounds = array<i64: 8, 768>}, {pipeline_mode = #tpu.pipeline_mode<synchronous>, transform_indices = @transform_1, window_bounds = array<i64: 768, 128>}, {pipeline_mode = #tpu.pipeline_mode<synchronous>, transform_indices = @transform_2, window_bounds = array<i64: 1, 2>}, {transform_indices = @transform_3, window_bounds = array<i64: 8, 2>}]} {
    %c0 = arith.constant 0 : index
    %c0_0 = arith.constant 0 : index
    %0 = vector.load %arg1[%c0, %c0_0] : memref<8x768xf32, #tpu.memory_space<vmem>>, vector<8x768xf32>
    %c0_1 = arith.constant 0 : index
    %c0_2 = arith.constant 0 : index
    %1 = vector.load %arg2[%c0_1, %c0_2] : memref<768x128xf32, #tpu.memory_space<vmem>>, vector<768x128xf32>
    %cst = arith.constant dense<0.000000e+00> : vector<8x128xf32>
    %2 = tpu.matmul %0, %1, %cst {dimension_numbers = #tpu.dot_dimension_numbers<[1], [0], [0], [1], [0, 0, 1, 1], [], []>} : vector<8x768xf32>, vector<768x128xf32>, vector<8x128xf32> -> vector<8x128xf32>
    %3 = vector.extract_strided_slice %2 {offsets = [0, 0], sizes = [8, 2], strides = [1, 1]} : vector<8x128xf32> to vector<8x2xf32>
    %c0_3 = arith.constant 0 : index
    %c0_4 = arith.constant 0 : index
    %4 = vector.load %arg3[%c0_3, %c0_4] : memref<1x2xf32, #tpu.memory_space<vmem>>, vector<1x2xf32>
    %5 = vector.broadcast %4 : vector<1x2xf32> to vector<8x2xf32>
    %6 = arith.addf %3, %5 : vector<8x2xf32>
    %c0_5 = arith.constant 0 : index
    %c0_6 = arith.constant 0 : index
    %7 = vector.load %arg4[%c0_5, %c0_6] : memref<8x2xf32, #tpu.memory_space<vmem>>, vector<8x2xf32>
    tpu.vector_store %arg4[%c0_5, %c0_6], %6 {strides = array<i32>} : memref<8x2xf32, #tpu.memory_space<vmem>>, vector<8x2xf32>,
    return
  }
  func.func @transform_0(%arg0: i32) -> (i32, i32) {
    %c0_i32 = arith.constant 0 : i32
    %c0_i32_0 = arith.constant 0 : i32
    return %arg0, %c0_i32 : i32, i32
  }
  func.func @transform_1(%arg0: i32) -> (i32, i32) {
    %c0_i32 = arith.constant 0 : i32
    %c0_i32_0 = arith.constant 0 : i32
    %c0_i32_1 = arith.constant 0 : i32
    return %c0_i32, %c0_i32_0 : i32, i32
  }
  func.func @transform_2(%arg0: i32) -> (i32, i32) {
    %c0_i32 = arith.constant 0 : i32
    %c0_i32_0 = arith.constant 0 : i32
    %c0_i32_1 = arith.constant 0 : i32
    return %c0_i32, %c0_i32_0 : i32, i32
  }
  func.func @transform_3(%arg0: i32) -> (i32, i32) {
    %c0_i32 = arith.constant 0 : i32
    %c0_i32_0 = arith.constant 0 : i32
    return %arg0, %c0_i32 : i32, i32
  }
}

</mosaic_0001>

<llo_original>
// kernel: classifier_head_pooler.1
$region0: #{classifier_head_pooler.1}
  #allocation0 [shape = 'u32[]', space=smem, size = 0x4, offset = 0x4, fixed_abs, tag = 'smem constant byte address 0x4 - core index']
  #allocation1 [shape = 'u32[144,128]{1,0:T(1,128)}', space=vmem, size = 0x12000, scoped, tag = 'internal scratch']
  %s0 = inlined_call_operand.hbm [shape: f32[8,768], index: 0, kind: input, shape index: {}]
  %s1 = inlined_call_operand.hbm [shape: f32[768,128], index: 1, kind: input, shape index: {}]
  %s2 = inlined_call_operand.vmem [shape: f32[1,2], index: 2, kind: input, shape index: {}]
  %s3 = inlined_call_operand.vmem [shape: f32[8,2], index: 3, kind: output, shape index: {}]
  %s4 = sld [smem:[#allocation0]]
  $region30: #{classifier_head_pooler.1} parent=0
    _
  %s6 = ssub.s32 1, %s4
  %s7 = scalar_select 0, %s6, %s4
  $region1: #{classifier_head_pooler.1} parent=0
    #allocation2 [shape = 'u8[24576]{0}', space=vmem, size = 0x6000, scoped, tag = 'input window, operand 0, single buffered']
    #allocation3 [shape = 's32[1]{0}', space=sflag, size = 0x4, scoped, tag = 'scoped memory for classifier_head_pooler.1']
    #allocation4 [shape = 'u8[393216]{0}', space=vmem, size = 0x60000, scoped, tag = 'input window, operand 1, single buffered']
    #allocation5 [shape = 's32[1]{0}', space=sflag, size = 0x4, scoped, tag = 'scoped memory for classifier_head_pooler.1']
    %8 = vsyncpa [#allocation3], 0
    %9 = vsyncpa [#allocation5], 0
    // Predicated region
    $region2: #{classifier_head_pooler.1} parent=1 // pred_check
      _
    $region3: #{classifier_head_pooler.1} parent=1 // pred_check_branch
      %11 = sbr.rel (0) target = $region5
    $region4: #{classifier_head_pooler.1} parent=1 // pred_region
      %s13 = ssub.s32 768, 768
      %14 = vsyncadd [#allocation3], %s13
      %s16 = sshll.u32 [#allocation2], 4
      %s17 = int_to_ptr.vmem [resolvable:$true] %s16
      %19 = dma.hbm_to_vmem [thread:$0]  %s0, 768, %s17, [#allocation3]
    $region5: #{classifier_head_pooler.1} parent=1 // pred_fallthru
      _
    // Predicated region
    $region6: #{classifier_head_pooler.1} parent=1 // pred_check
      _
    $region7: #{classifier_head_pooler.1} parent=1 // pred_check_branch
      %21 = sbr.rel (0) target = $region9
    $region8: #{classifier_head_pooler.1} parent=1 // pred_region
      %s23 = ssub.s32 12288, 12288
      %24 = vsyncadd [#allocation5], %s23
      %s25 = sshll.u32 [#allocation4], 4
      %s26 = int_to_ptr.vmem [resolvable:$true] %s25
      %31 = dma.hbm_to_vmem [thread:$0]  %s1, 12288, %s26, [#allocation5], 128, 128, 8
    $region9: #{classifier_head_pooler.1} parent=1 // pred_fallthru
      _
    // Predicated region
    $region10: #{classifier_head_pooler.1} parent=1 // pred_check
      _
    $region11: #{classifier_head_pooler.1} parent=1 // pred_check_branch
      %33 = sbr.rel (0) target = $region13
    $region12: #{classifier_head_pooler.1} parent=1 // pred_region
      _
    $region13: #{classifier_head_pooler.1} parent=1 // pred_fallthru
      _
    // Predicated region
    $region14: #{classifier_head_pooler.1} parent=1 // pred_check
      _
    $region15: #{classifier_head_pooler.1} parent=1 // pred_check_branch
      %35 = sbr.rel (0) target = $region17
    $region16: #{classifier_head_pooler.1} parent=1 // pred_region
      %36 = dma.done [#allocation3], 768
    $region17: #{classifier_head_pooler.1} parent=1 // pred_fallthru
      _
    // Predicated region
    $region18: #{classifier_head_pooler.1} parent=1 // pred_check
      _
    $region19: #{classifier_head_pooler.1} parent=1 // pred_check_branch
      %38 = sbr.rel (0) target = $region21
    $region20: #{classifier_head_pooler.1} parent=1 // pred_region
      %39 = dma.done [#allocation5], 12288
    $region21: #{classifier_head_pooler.1} parent=1 // pred_fallthru
      _
    %v40 = vld [vmem:[#allocation2] sm:$0xff]
    %v41 = vld [vmem:[#allocation2 + $0x8] sm:$0xff]
    %v42 = vld [vmem:[#allocation2 + $0x10] sm:$0xff]
    %v43 = vld [vmem:[#allocation2 + $0x18] sm:$0xff]
    %v44 = vld [vmem:[#allocation2 + $0x20] sm:$0xff]
    %v45 = vld [vmem:[#allocation2 + $0x28] sm:$0xff]
    %v46 = vld [vmem:[#allocation4] sm:$0xff]
    %v47 = vld [vmem:[#allocation4 + $0x8] sm:$0xff]
    %v48 = vld [vmem:[#allocation4 + $0x10] sm:$0xff]
    %v49 = vld [vmem:[#allocation4 + $0x18] sm:$0xff]
    %v50 = vld [vmem:[#allocation4 + $0x20] sm:$0xff]
    %v51 = vld [vmem:[#allocation4 + $0x28] sm:$0xff]
    %v52 = vld [vmem:[#allocation4 + $0x30] sm:$0xff]
    %v53 = vld [vmem:[#allocation4 + $0x38] sm:$0xff]
    %v54 = vld [vmem:[#allocation4 + $0x40] sm:$0xff]
    %v55 = vld [vmem:[#allocation4 + $0x48] sm:$0xff]
    %v56 = vld [vmem:[#allocation4 + $0x50] sm:$0xff]
    %v57 = vld [vmem:[#allocation4 + $0x58] sm:$0xff]
    %v58 = vld [vmem:[#allocation4 + $0x60] sm:$0xff]
    %v59 = vld [vmem:[#allocation4 + $0x68] sm:$0xff]
    %v60 = vld [vmem:[#allocation4 + $0x70] sm:$0xff]
    %v61 = vld [vmem:[#allocation4 + $0x78] sm:$0xff]
    %v62 = vld [vmem:[#allocation4 + $0x80] sm:$0xff]
    %v63 = vld [vmem:[#allocation4 + $0x88] sm:$0xff]
    %v64 = vld [vmem:[#allocation4 + $0x90] sm:$0xff]
    %v65 = vld [vmem:[#allocation4 + $0x98] sm:$0xff]
    %v66 = vld [vmem:[#allocation4 + $0xa0] sm:$0xff]
    %v67 = vld [vmem:[#allocation4 + $0xa8] sm:$0xff]
    %v68 = vld [vmem:[#allocation4 + $0xb0] sm:$0xff]
    %v69 = vld [vmem:[#allocation4 + $0xb8] sm:$0xff]
    %v70 = vld [vmem:[#allocation4 + $0xc0] sm:$0xff]
    %v71 = vld [vmem:[#allocation4 + $0xc8] sm:$0xff]
    %v72 = vld [vmem:[#allocation4 + $0xd0] sm:$0xff]
    %v73 = vld [vmem:[#allocation4 + $0xd8] sm:$0xff]
    %v74 = vld [vmem:[#allocation4 + $0xe0] sm:$0xff]
    %v75 = vld [vmem:[#allocation4 + $0xe8] sm:$0xff]
    %v76 = vld [vmem:[#allocation4 + $0xf0] sm:$0xff]
    %v77 = vld [vmem:[#allocation4 + $0xf8] sm:$0xff]
    %v78 = vld [vmem:[#allocation4 + $0x100] sm:$0xff]
    %v79 = vld [vmem:[#allocation4 + $0x108] sm:$0xff]
    %v80 = vld [vmem:[#allocation4 + $0x110] sm:$0xff]
    %v81 = vld [vmem:[#allocation4 + $0x118] sm:$0xff]
    %v82 = vld [vmem:[#allocation4 + $0x120] sm:$0xff]
    %v83 = vld [vmem:[#allocation4 + $0x128] sm:$0xff]
    %v84 = vld [vmem:[#allocation4 + $0x130] sm:$0xff]
    %v85 = vld [vmem:[#allocation4 + $0x138] sm:$0xff]
    %v86 = vld [vmem:[#allocation4 + $0x140] sm:$0xff]
    %v87 = vld [vmem:[#allocation4 + $0x148] sm:$0xff]
    %v88 = vld [vmem:[#allocation4 + $0x150] sm:$0xff]
    %v89 = vld [vmem:[#allocation4 + $0x158] sm:$0xff]
    %v90 = vld [vmem:[#allocation4 + $0x160] sm:$0xff]
    %v91 = vld [vmem:[#allocation4 + $0x168] sm:$0xff]
    %v92 = vld [vmem:[#allocation4 + $0x170] sm:$0xff]
    %v93 = vld [vmem:[#allocation4 + $0x178] sm:$0xff]
    %v94 = vld [vmem:[#allocation4 + $0x180] sm:$0xff]
    %v95 = vld [vmem:[#allocation4 + $0x188] sm:$0xff]
    %v96 = vld [vmem:[#allocation4 + $0x190] sm:$0xff]
    %v97 = vld [vmem:[#allocation4 + $0x198] sm:$0xff]
    %v98 = vld [vmem:[#allocation4 + $0x1a0] sm:$0xff]
    %v99 = vld [vmem:[#allocation4 + $0x1a8] sm:$0xff]
    %v100 = vld [vmem:[#allocation4 + $0x1b0] sm:$0xff]
    %v101 = vld [vmem:[#allocation4 + $0x1b8] sm:$0xff]
    %v102 = vld [vmem:[#allocation4 + $0x1c0] sm:$0xff]
    %v103 = vld [vmem:[#allocation4 + $0x1c8] sm:$0xff]
    %v104 = vld [vmem:[#allocation4 + $0x1d0] sm:$0xff]
    %v105 = vld [vmem:[#allocation4 + $0x1d8] sm:$0xff]
    %v106 = vld [vmem:[#allocation4 + $0x1e0] sm:$0xff]
    %v107 = vld [vmem:[#allocation4 + $0x1e8] sm:$0xff]
    %v108 = vld [vmem:[#allocation4 + $0x1f0] sm:$0xff]
    %v109 = vld [vmem:[#allocation4 + $0x1f8] sm:$0xff]
    %v110 = vld [vmem:[#allocation4 + $0x200] sm:$0xff]
    %v111 = vld [vmem:[#allocation4 + $0x208] sm:$0xff]
    %v112 = vld [vmem:[#allocation4 + $0x210] sm:$0xff]
    %v113 = vld [vmem:[#allocation4 + $0x218] sm:$0xff]
    %v114 = vld [vmem:[#allocation4 + $0x220] sm:$0xff]
    %v115 = vld [vmem:[#allocation4 + $0x228] sm:$0xff]
    %v116 = vld [vmem:[#allocation4 + $0x230] sm:$0xff]
    %v117 = vld [vmem:[#allocation4 + $0x238] sm:$0xff]
    %v118 = vld [vmem:[#allocation4 + $0x240] sm:$0xff]
    %v119 = vld [vmem:[#allocation4 + $0x248] sm:$0xff]
    %v120 = vld [vmem:[#allocation4 + $0x250] sm:$0xff]
    %v121 = vld [vmem:[#allocation4 + $0x258] sm:$0xff]
    %v122 = vld [vmem:[#allocation4 + $0x260] sm:$0xff]
    %v123 = vld [vmem:[#allocation4 + $0x268] sm:$0xff]
    %v124 = vld [vmem:[#allocation4 + $0x270] sm:$0xff]
    %v125 = vld [vmem:[#allocation4 + $0x278] sm:$0xff]
    %v126 = vld [vmem:[#allocation4 + $0x280] sm:$0xff]
    %v127 = vld [vmem:[#allocation4 + $0x288] sm:$0xff]
    %v128 = vld [vmem:[#allocation4 + $0x290] sm:$0xff]
    %v129 = vld [vmem:[#allocation4 + $0x298] sm:$0xff]
    %v130 = vld [vmem:[#allocation4 + $0x2a0] sm:$0xff]
    %v131 = vld [vmem:[#allocation4 + $0x2a8] sm:$0xff]
    %v132 = vld [vmem:[#allocation4 + $0x2b0] sm:$0xff]
    %v133 = vld [vmem:[#allocation4 + $0x2b8] sm:$0xff]
    %v134 = vld [vmem:[#allocation4 + $0x2c0] sm:$0xff]
    %v135 = vld [vmem:[#allocation4 + $0x2c8] sm:$0xff]
    %v136 = vld [vmem:[#allocation4 + $0x2d0] sm:$0xff]
    %v137 = vld [vmem:[#allocation4 + $0x2d8] sm:$0xff]
    %v138 = vld [vmem:[#allocation4 + $0x2e0] sm:$0xff]
    %v139 = vld [vmem:[#allocation4 + $0x2e8] sm:$0xff]
    %v140 = vld [vmem:[#allocation4 + $0x2f0] sm:$0xff]
    %v141 = vld [vmem:[#allocation4 + $0x2f8] sm:$0xff]
    %142 = vmatprep.subr.mxu0 0.0
    %143 = vmatpush1.msra.mxu0 %v61
    %144 = vmatprep.subr.mxu0 0.0
    %145 = vmatpush1.msra.mxu0 %v60
    %146 = vmatprep.subr.mxu0 0.0
    %147 = vmatpush1.msra.mxu0 %v59
    %148 = vmatprep.subr.mxu0 0.0
    %149 = vmatpush1.msra.mxu0 %v58
    %150 = vmatprep.subr.mxu0 0.0
    %151 = vmatpush1.msra.mxu0 %v57
    %152 = vmatprep.subr.mxu0 0.0
    %153 = vmatpush1.msra.mxu0 %v56
    %154 = vmatprep.subr.mxu0 0.0
    %155 = vmatpush1.msra.mxu0 %v55
    %156 = vmatprep.subr.mxu0 0.0
    %157 = vmatpush1.msra.mxu0 %v54
    %158 = vmatprep.subr.mxu0 0.0
    %159 = vmatpush1.msra.mxu0 %v53
    %160 = vmatprep.subr.mxu0 0.0
    %161 = vmatpush1.msra.mxu0 %v52
    %162 = vmatprep.subr.mxu0 0.0
    %163 = vmatpush1.msra.mxu0 %v51
    %164 = vmatprep.subr.mxu0 0.0
    %165 = vmatpush1.msra.mxu0 %v50
    %166 = vmatprep.subr.mxu0 0.0
    %167 = vmatpush1.msra.mxu0 %v49
    %168 = vmatprep.subr.mxu0 0.0
    %169 = vmatpush1.msra.mxu0 %v48
    %170 = vmatprep.subr.mxu0 0.0
    %171 = vmatpush1.msra.mxu0 %v47
    %172 = vmatprep.subr.mxu0 0.0
    %173 = vmatpush1.msra.mxu0 %v46
    %174 = vmatprep.subr.mxu0 0.0
    %175 = vmatpush2.msra.mxu0 %v77
    %176 = vmatprep.subr.mxu0 0.0
    %177 = vmatpush2.msra.mxu0 %v76
    %178 = vmatprep.subr.mxu0 0.0
    %179 = vmatpush2.msra.mxu0 %v75
    %180 = vmatprep.subr.mxu0 0.0
    %181 = vmatpush2.msra.mxu0 %v74
    %182 = vmatprep.subr.mxu0 0.0
    %183 = vmatpush2.msra.mxu0 %v73
    %184 = vmatprep.subr.mxu0 0.0
    %185 = vmatpush2.msra.mxu0 %v72
    %186 = vmatprep.subr.mxu0 0.0
    %187 = vmatpush2.msra.mxu0 %v71
    %188 = vmatprep.subr.mxu0 0.0
    %189 = vmatpush2.msra.mxu0 %v70
    %190 = vmatprep.subr.mxu0 0.0
    %191 = vmatpush2.msra.mxu0 %v69
    %192 = vmatprep.subr.mxu0 0.0
    %193 = vmatpush2.msra.mxu0 %v68
    %194 = vmatprep.subr.mxu0 0.0
    %195 = vmatpush2.msra.mxu0 %v67
    %196 = vmatprep.subr.mxu0 0.0
    %197 = vmatpush2.msra.mxu0 %v66
    %198 = vmatprep.subr.mxu0 0.0
    %199 = vmatpush2.msra.mxu0 %v65
    %200 = vmatprep.subr.mxu0 0.0
    %201 = vmatpush2.msra.mxu0 %v64
    %202 = vmatprep.subr.mxu0 0.0
    %203 = vmatpush2.msra.mxu0 %v63
    %204 = vmatprep.subr.mxu0 0.0
    %205 = vmatpush2.msra.mxu0 %v62
    %206 = vmatprep.mubr.f32.mxu0 %v41
    %207 = vmatmul.mubr.f32.gmra.mxu0 %v40
    %v208 = vpop.f32.mrf.mxu0
    %v209 = vadd.f32 0.0, %v208
    %v210 = vpop.f32.mrf.mxu0
    %211 = vdwg.mxu0
    %212 = vmatprep.subr.mxu0 0.0
    %213 = vmatpush1.msra.mxu0 %v93
    %214 = vmatprep.subr.mxu0 0.0
    %215 = vmatpush1.msra.mxu0 %v92
    %216 = vmatprep.subr.mxu0 0.0
    %217 = vmatpush1.msra.mxu0 %v91
    %218 = vmatprep.subr.mxu0 0.0
    %219 = vmatpush1.msra.mxu0 %v90
    %220 = vmatprep.subr.mxu0 0.0
    %221 = vmatpush1.msra.mxu0 %v89
    %222 = vmatprep.subr.mxu0 0.0
    %223 = vmatpush1.msra.mxu0 %v88
    %224 = vmatprep.subr.mxu0 0.0
    %225 = vmatpush1.msra.mxu0 %v87
    %226 = vmatprep.subr.mxu0 0.0
    %227 = vmatpush1.msra.mxu0 %v86
    %228 = vmatprep.subr.mxu0 0.0
    %229 = vmatpush1.msra.mxu0 %v85
    %230 = vmatprep.subr.mxu0 0.0
    %231 = vmatpush1.msra.mxu0 %v84
    %232 = vmatprep.subr.mxu0 0.0
    %233 = vmatpush1.msra.mxu0 %v83
    %234 = vmatprep.subr.mxu0 0.0
    %235 = vmatpush1.msra.mxu0 %v82
    %236 = vmatprep.subr.mxu0 0.0
    %237 = vmatpush1.msra.mxu0 %v81
    %238 = vmatprep.subr.mxu0 0.0
    %239 = vmatpush1.msra.mxu0 %v80
    %240 = vmatprep.subr.mxu0 0.0
    %241 = vmatpush1.msra.mxu0 %v79
    %242 = vmatprep.subr.mxu0 0.0
    %243 = vmatpush1.msra.mxu0 %v78
    %244 = vmatprep.subr.mxu0 0.0
    %245 = vmatpush2.msra.mxu0 %v109
    %246 = vmatprep.subr.mxu0 0.0
    %247 = vmatpush2.msra.mxu0 %v108
    %248 = vmatprep.subr.mxu0 0.0
    %249 = vmatpush2.msra.mxu0 %v107
    %250 = vmatprep.subr.mxu0 0.0
    %251 = vmatpush2.msra.mxu0 %v106
    %252 = vmatprep.subr.mxu0 0.0
    %253 = vmatpush2.msra.mxu0 %v105
    %254 = vmatprep.subr.mxu0 0.0
    %255 = vmatpush2.msra.mxu0 %v104
    %256 = vmatprep.subr.mxu0 0.0
    %257 = vmatpush2.msra.mxu0 %v103
    %258 = vmatprep.subr.mxu0 0.0
    %259 = vmatpush2.msra.mxu0 %v102
    %260 = vmatprep.subr.mxu0 0.0
    %261 = vmatpush2.msra.mxu0 %v101
    %262 = vmatprep.subr.mxu0 0.0
    %263 = vmatpush2.msra.mxu0 %v100
    %264 = vmatprep.subr.mxu0 0.0
    %265 = vmatpush2.msra.mxu0 %v99
    %266 = vmatprep.subr.mxu0 0.0
    %267 = vmatpush2.msra.mxu0 %v98
    %268 = vmatprep.subr.mxu0 0.0
    %269 = vmatpush2.msra.mxu0 %v97
    %270 = vmatprep.subr.mxu0 0.0
    %271 = vmatpush2.msra.mxu0 %v96
    %272 = vmatprep.subr.mxu0 0.0
    %273 = vmatpush2.msra.mxu0 %v95
    %274 = vmatprep.subr.mxu0 0.0
    %275 = vmatpush2.msra.mxu0 %v94
    %276 = vmatprep.mubr.f32.mxu0 %v43
    %277 = vmatmul.mubr.f32.gmra.mxu0 %v42
    %v278 = vpop.f32.mrf.mxu0
    %v279 = vadd.f32 %v209, %v278
    %v280 = vpop.f32.mrf.mxu0
    %281 = vdwg.mxu0
    %282 = vmatprep.subr.mxu0 0.0
    %283 = vmatpush1.msra.mxu0 %v125
    %284 = vmatprep.subr.mxu0 0.0
    %285 = vmatpush1.msra.mxu0 %v124
    %286 = vmatprep.subr.mxu0 0.0
    %287 = vmatpush1.msra.mxu0 %v123
    %288 = vmatprep.subr.mxu0 0.0
    %289 = vmatpush1.msra.mxu0 %v122
    %290 = vmatprep.subr.mxu0 0.0
    %291 = vmatpush1.msra.mxu0 %v121
    %292 = vmatprep.subr.mxu0 0.0
    %293 = vmatpush1.msra.mxu0 %v120
    %294 = vmatprep.subr.mxu0 0.0
    %295 = vmatpush1.msra.mxu0 %v119
    %296 = vmatprep.subr.mxu0 0.0
    %297 = vmatpush1.msra.mxu0 %v118
    %298 = vmatprep.subr.mxu0 0.0
    %299 = vmatpush1.msra.mxu0 %v117
    %300 = vmatprep.subr.mxu0 0.0
    %301 = vmatpush1.msra.mxu0 %v116
    %302 = vmatprep.subr.mxu0 0.0
    %303 = vmatpush1.msra.mxu0 %v115
    %304 = vmatprep.subr.mxu0 0.0
    %305 = vmatpush1.msra.mxu0 %v114
    %306 = vmatprep.subr.mxu0 0.0
    %307 = vmatpush1.msra.mxu0 %v113
    %308 = vmatprep.subr.mxu0 0.0
    %309 = vmatpush1.msra.mxu0 %v112
    %310 = vmatprep.subr.mxu0 0.0
    %311 = vmatpush1.msra.mxu0 %v111
    %312 = vmatprep.subr.mxu0 0.0
    %313 = vmatpush1.msra.mxu0 %v110
    %314 = vmatprep.subr.mxu0 0.0
    %315 = vmatpush2.msra.mxu0 %v141
    %316 = vmatprep.subr.mxu0 0.0
    %317 = vmatpush2.msra.mxu0 %v140
    %318 = vmatprep.subr.mxu0 0.0
    %319 = vmatpush2.msra.mxu0 %v139
    %320 = vmatprep.subr.mxu0 0.0
    %321 = vmatpush2.msra.mxu0 %v138
    %322 = vmatprep.subr.mxu0 0.0
    %323 = vmatpush2.msra.mxu0 %v137
    %324 = vmatprep.subr.mxu0 0.0
    %325 = vmatpush2.msra.mxu0 %v136
    %326 = vmatprep.subr.mxu0 0.0
    %327 = vmatpush2.msra.mxu0 %v135
    %328 = vmatprep.subr.mxu0 0.0
    %329 = vmatpush2.msra.mxu0 %v134
    %330 = vmatprep.subr.mxu0 0.0
    %331 = vmatpush2.msra.mxu0 %v133
    %332 = vmatprep.subr.mxu0 0.0
    %333 = vmatpush2.msra.mxu0 %v132
    %334 = vmatprep.subr.mxu0 0.0
    %335 = vmatpush2.msra.mxu0 %v131
    %336 = vmatprep.subr.mxu0 0.0
    %337 = vmatpush2.msra.mxu0 %v130
    %338 = vmatprep.subr.mxu0 0.0
    %339 = vmatpush2.msra.mxu0 %v129
    %340 = vmatprep.subr.mxu0 0.0
    %341 = vmatpush2.msra.mxu0 %v128
    %342 = vmatprep.subr.mxu0 0.0
    %343 = vmatpush2.msra.mxu0 %v127
    %344 = vmatprep.subr.mxu0 0.0
    %345 = vmatpush2.msra.mxu0 %v126
    %346 = vmatprep.mubr.f32.mxu0 %v45
    %347 = vmatmul.mubr.f32.gmra.mxu0 %v44
    %v348 = vpop.f32.mrf.mxu0
    %v349 = vadd.f32 %v279, %v348
    %v350 = vpop.f32.mrf.mxu0
    %351 = vdwg.mxu0
    %v352 = vld [vmem:[%s2] sm:$0x1]
    %v354 = vlaneseq
    %v355 = vshrl.u32 %v354, 7
    %v356 = vsub.s32 0, %v355
    %v357 = vrot.slane %v352, %v356
    %v359 = vadd.f32 %v349, %v357
    %vm360 = vcmask 15360
    %361 = vst.msk [vmem:[%s3] sm:$0xff] %vm360, %v359
    // Predicated region
    $region22: #{classifier_head_pooler.1} parent=1 // pred_check
      _
    $region23: #{classifier_head_pooler.1} parent=1 // pred_check_branch
      %363 = sbr.rel (0) target = $region25
    $region24: #{classifier_head_pooler.1} parent=1 // pred_region
      _
    $region25: #{classifier_head_pooler.1} parent=1 // pred_fallthru
      _
    // Predicated region
    $region26: #{classifier_head_pooler.1} parent=1 // pred_check
      _
    $region27: #{classifier_head_pooler.1} parent=1 // pred_check_branch
      %365 = sbr.rel (0) target = $region29
    $region28: #{classifier_head_pooler.1} parent=1 // pred_region
      _
    $region29: #{classifier_head_pooler.1} parent=1 // pred_fallthru
      _
    %366 = vsyncpa [#allocation3], 1
    %367 = vsyncpa [#allocation5], 1

</llo_original>
